<compile_context>
chip_gen: v6e
topology: v6e:2x2x1
jax: 0.10.0
libtpu: 0.0.40
codegen_flags: <defaults>
</compile_context>

<pallas_src>
import functools

import jax
import jax.numpy as jnp
from jax import lax
from jax.experimental import pallas as pl
from jax.experimental.pallas import tpu as pltpu


_LANE = 128
_SUBLANE = 8
# Weight blocks bigger than this are column-tiled instead of kept resident
# (sized with v7x's 64 MiB physical VMEM in mind).
_RESIDENT_WEIGHT_BYTES = 16 << 20
_WEIGHT_TILE_BYTES = 8 << 20


def _round_up(n, m):
    return ((n + m - 1) // m) * m


def _pick_tb(batch):
    """Batch tile: big enough for the MXU, small enough to keep >=2 grid steps."""
    for cand in (512, 256, 128, 64, 32, 16, 8):
        if batch >= 2 * cand:
            return cand
    return max(_SUBLANE, _round_up(min(batch, 512), _SUBLANE))


def _resident_weight_spec(dp, cp):
    """Constant-index weight block; single-buffer it when the API allows."""
    idx = lambda j, i: (0, 0)
    try:
        return pl.BlockSpec((dp, cp), idx, pipeline_mode=pl.Buffered(1)), 1
    except Exception:  # older JAX without pipeline_mode -> default double buffer
        return pl.BlockSpec((dp, cp), idx), 2


def _protocls_kernel(x_ref, w_ref, out_ref, *, inv_temp):
    """One (column-tile, batch-tile): logits = (l2_normalize(x) @ W_t) * (1/temp)."""
    x = x_ref[...]                                              # (TB, Dp) f32
    sumsq = jnp.sum(x * x, axis=-1, keepdims=True)              # (TB, 1)
    # F.normalize(eps=1e-12): x * rsqrt(max(sumsq, 1e-24)).  rsqrt runs on the
    # EUP slot; 1/temp is folded into the same per-row scalar (bf16 relative
    # precision is scale-invariant, so folding costs no mantissa bits).
    scale = lax.rsqrt(jnp.maximum(sumsq, 1e-24)) * inv_temp     # (TB, 1)
    xs = (x * scale).astype(jnp.bfloat16)                       # bf16 MXU operand
    out_ref[...] = jnp.dot(
        xs, w_ref[...], preferred_element_type=jnp.float32
    ).astype(out_ref.dtype)


def prepare_weight(w):
    """One-time prep of fc.weight ([out_dim, in_dim] f32, rows L2-normalized):
    transpose, cast to bf16, zero-pad to a lane-dense [Dp, Cp] buffer."""
    out_dim, in_dim = w.shape
    dp, cp = _round_up(in_dim, _LANE), _round_up(out_dim, _LANE)
    return jnp.zeros((dp, cp), jnp.bfloat16).at[:in_dim, :out_dim].set(
        w.T.astype(jnp.bfloat16))


@functools.partial(jax.jit, static_argnames=("out_dim", "temp", "tb", "out_dtype"))
def protocls_forward(x, w_p, *, out_dim, temp=0.05, tb=None, out_dtype=jnp.float32):
    """x: [B, in_dim] f32; w_p: prepare_weight() output ([Dp, Cp] bf16)."""
    B, D = x.shape
    Dp, Cp = w_p.shape
    C = out_dim
    assert Dp == _round_up(D, _LANE) and Cp >= C

    tb = _pick_tb(B) if tb is None else tb
    n_b = pl.cdiv(B, tb)
    Bp = n_b * tb

    # Pad x only when needed; padding stays f32.  Zero cols don't change the
    # norm; all-zero padded rows normalize to exactly 0 thanks to the clamp.
    if Bp != B or Dp != D:
        x_p = jnp.pad(x, ((0, Bp - B), (0, Dp - D)))
    else:
        x_p = x

    # Weight tiling: fully resident (single-buffered) when small enough,
    # otherwise column-tiled with the column axis OUTERMOST so every weight
    # tile is DMA'd once and reused across all batch tiles.
    if Dp * Cp * 2 <= _RESIDENT_WEIGHT_BYTES:
        tn = Cp
        w_spec, w_bufs = _resident_weight_spec(Dp, Cp)
    else:
        tn = min(Cp, max(_LANE, (_WEIGHT_TILE_BYTES // (Dp * 2)) // _LANE * _LANE))
        w_spec, w_bufs = pl.BlockSpec((Dp, tn), lambda j, i: (0, j)), 2
    n_c = pl.cdiv(Cp, tn)

    out_bytes = jnp.dtype(out_dtype).itemsize
    est = (w_bufs * Dp * tn * 2          # weight buffer(s), bf16
           + 2 * tb * Dp * 4             # double-buffered f32 x tiles
           + 2 * tb * tn * out_bytes)    # double-buffered out tiles
    vmem_limit = int(min(40 << 20, max(est + est // 2 + (2 << 20), 16 << 20)))

    logits_p = pl.pallas_call(
        functools.partial(_protocls_kernel, inv_temp=1.0 / temp),
        out_shape=jax.ShapeDtypeStruct((Bp, Cp), out_dtype),
        grid=(n_c, n_b),                                   # columns outer, batch inner
        in_specs=[
            pl.BlockSpec((tb, Dp), lambda j, i: (i, 0)),   # batch tile of x (f32)
            w_spec,                                        # weight tile (bf16)
        ],
        out_specs=pl.BlockSpec((tb, tn), lambda j, i: (i, j)),
        compiler_params=pltpu.CompilerParams(
            dimension_semantics=("parallel", "parallel"),
            vmem_limit_bytes=vmem_limit,
        ),
    )(x_p, w_p)

    if Bp == B and Cp == C:
        return logits_p                  # no padding -> skip the extra HBM pass
    return logits_p[:B, :C]


def init_params(key, in_dim, out_dim):
    """ProtoCLS.__init__: nn.Linear(in_dim, out_dim, bias=False) + weight_norm().
    Returns fc.weight in PyTorch layout [out_dim, in_dim]."""
    w = jax.random.normal(key, (out_dim, in_dim), jnp.float32)
    return w / jnp.linalg.norm(w, axis=1, keepdims=True)


def reference_forward_f32(x, w, temp=0.05):
    """Pure-f32 module semantics (F.normalize then fc / temp)."""
    xn = x / jnp.maximum(jnp.linalg.norm(x, axis=-1, keepdims=True), 1e-12)
    return (xn @ w.T) / temp


def reference_forward_matched(x, w, temp=0.05):
    """Same precision recipe as the kernel: f32 norm, bf16 operands, f32 accum."""
    scale = lax.rsqrt(
        jnp.maximum(jnp.sum(x * x, axis=-1, keepdims=True), 1e-24)) * (1.0 / temp)
    xs = (x * scale).astype(jnp.bfloat16)
    return jnp.dot(xs, w.T.astype(jnp.bfloat16), preferred_element_type=jnp.float32)


if __name__ == "__main__":
    # Small shapes consistent with ProtoCLS(in_dim, out_dim)
    B, in_dim, out_dim = 8, 32, 16
    temp = 0.05

    key = jax.random.PRNGKey(0)
    kx, kw = jax.random.split(key)
    x = jax.random.normal(kx, (B, in_dim), jnp.float32)
    w = init_params(kw, in_dim, out_dim)        # [out_dim, in_dim], done once
    w_p = prepare_weight(w)                     # padded bf16 buffer, done once

    logits = protocls_forward(x, w_p, out_dim=out_dim, temp=temp)
    jax.block_until_ready(logits)
    assert logits.shape == (B, out_dim)
    assert logits.dtype == jnp.float32

    # Tight check against a precision-matched (f32 norm, bf16-matmul) reference.
    ref_m = reference_forward_matched(x, w, temp=temp)
    assert jnp.allclose(logits, ref_m, atol=2e-3, rtol=2e-3)

    # Loose semantic check against the pure-f32 module math; slack only covers
    # bf16 rounding of the matmul operands.
    ref_f = reference_forward_f32(x, w, temp=temp)
    assert jnp.allclose(logits, ref_f, atol=0.15, rtol=0.02)

    print("KERNEL_OK")
</pallas_src>

<mosaic_0001>
module attributes {stable_mosaic.version = 11 : i64} {
  func.func @_protocls_kernel(%arg0: i32, %arg1: i32, %arg2: memref<8x128xf32, #tpu.memory_space<vmem>>, %arg3: memref<128x128xbf16, #tpu.memory_space<vmem>>, %arg4: memref<8x128xf32, #tpu.memory_space<vmem>>) attributes {dimension_semantics = [#tpu.dimension_semantics<parallel>, #tpu.dimension_semantics<parallel>], iteration_bounds = array<i64: 1, 1>, scalar_prefetch = 0 : i64, scratch_operands = 0 : i64, tpu.core_type = #tpu.core_type<tc>, window_params = [{transform_indices = @transform_0, window_bounds = array<i64: 8, 128>}, {pipeline_mode = #tpu.pipeline_mode<synchronous>, transform_indices = @transform_1, window_bounds = array<i64: 128, 128>}, {transform_indices = @transform_2, window_bounds = array<i64: 8, 128>}]} {
    %c0 = arith.constant 0 : index
    %c0_0 = arith.constant 0 : index
    %0 = vector.load %arg2[%c0, %c0_0] : memref<8x128xf32, #tpu.memory_space<vmem>>, vector<8x128xf32>
    %1 = arith.mulf %0, %0 : vector<8x128xf32>
    %cst = arith.constant dense<0.000000e+00> : vector<8xf32>
    %2 = vector.multi_reduction <add>, %1, %cst [1] : vector<8x128xf32> to vector<8xf32>
    %3 = vector.shape_cast %2 : vector<8xf32> to vector<8x1xf32>
    %cst_1 = arith.constant 1.000000e-24 : f32
    %4 = vector.broadcast %cst_1 : f32 to vector<8x1xf32>
    %5 = arith.maximumf %3, %4 : vector<8x1xf32>
    %6 = math.rsqrt %5 : vector<8x1xf32>
    %cst_2 = arith.constant 2.000000e+01 : f32
    %7 = vector.broadcast %cst_2 : f32 to vector<8x1xf32>
    %8 = arith.mulf %6, %7 : vector<8x1xf32>
    %9 = vector.broadcast %8 : vector<8x1xf32> to vector<8x128xf32>
    %10 = arith.mulf %0, %9 : vector<8x128xf32>
    %11 = arith.truncf %10 : vector<8x128xf32> to vector<8x128xbf16>
    %c0_3 = arith.constant 0 : index
    %c0_4 = arith.constant 0 : index
    %12 = vector.load %arg3[%c0_3, %c0_4] : memref<128x128xbf16, #tpu.memory_space<vmem>>, vector<128x128xbf16>
    %cst_5 = arith.constant dense<0.000000e+00> : vector<8x128xf32>
    %13 = tpu.matmul %11, %12, %cst_5 {dimension_numbers = #tpu.dot_dimension_numbers<[1], [0], [0], [1], [0, 0, 1, 1], [], []>} : vector<8x128xbf16>, vector<128x128xbf16>, vector<8x128xf32> -> vector<8x128xf32>
    %c0_6 = arith.constant 0 : index
    %c0_7 = arith.constant 0 : index
    %14 = vector.load %arg4[%c0_6, %c0_7] : memref<8x128xf32, #tpu.memory_space<vmem>>, vector<8x128xf32>
    tpu.vector_store %arg4[%c0_6, %c0_7], %13 {strides = array<i32>} : memref<8x128xf32, #tpu.memory_space<vmem>>, vector<8x128xf32>,
    return
  }
  func.func @transform_0(%arg0: i32, %arg1: i32) -> (i32, i32) {
    %c0_i32 = arith.constant 0 : i32
    %c0_i32_0 = arith.constant 0 : i32
    return %arg1, %c0_i32 : i32, i32
  }
  func.func @transform_1(%arg0: i32, %arg1: i32) -> (i32, i32) {
    %c0_i32 = arith.constant 0 : i32
    %c0_i32_0 = arith.constant 0 : i32
    %c0_i32_1 = arith.constant 0 : i32
    return %c0_i32, %c0_i32_0 : i32, i32
  }
  func.func @transform_2(%arg0: i32, %arg1: i32) -> (i32, i32) {
    %c0_i32 = arith.constant 0 : i32
    return %arg1, %arg0 : i32, i32
  }
}

</mosaic_0001>

<llo_original>
// kernel: protocls_forward.1
$region0: #{protocls_forward.1}
  #allocation0 [shape = 'u32[]', space=smem, size = 0x4, offset = 0x4, fixed_abs, tag = 'smem constant byte address 0x4 - core index']
  #allocation1 [shape = 'u32[144,128]{1,0:T(1,128)}', space=vmem, size = 0x12000, scoped, tag = 'internal scratch']
  %s0 = inlined_call_operand.vmem [shape: f32[8,128], index: 0, kind: input, shape index: {}]
  %s1 = inlined_call_operand.hbm [shape: bf16[128,128], index: 1, kind: input, shape index: {}]
  %s2 = inlined_call_operand.hbm [shape: f32[8,128], index: 2, kind: output, shape index: {}]
  %s3 = sld [smem:[#allocation0]]
  $region22: #{protocls_forward.1} parent=0
    _
  %s5 = ssub.s32 1, %s3
  %s6 = scalar_select 0, %s5, %s3
  $region1: #{protocls_forward.1} parent=0
    #allocation2 [shape = 'u8[32768]{0}', space=vmem, size = 0x8000, scoped, tag = 'input window, operand 1, single buffered']
    #allocation3 [shape = 's32[1]{0}', space=sflag, size = 0x4, scoped, tag = 'scoped memory for protocls_forward.1']
    #allocation4 [shape = 's32[1]{0}', space=sflag, size = 0x4, scoped, tag = 'scoped memory for protocls_forward.1']
    #allocation5 [shape = 'u8[4096]{0}', space=vmem, size = 0x1000, scoped, tag = 'output window, operand 0, single buffered']
    %7 = vsyncpa [#allocation3], 0
    %8 = vsyncpa [#allocation4], 0
    // Predicated region
    $region2: #{protocls_forward.1} parent=1 // pred_check
      _
    $region3: #{protocls_forward.1} parent=1 // pred_check_branch
      %10 = sbr.rel (0) target = $region5
    $region4: #{protocls_forward.1} parent=1 // pred_region
      _
    $region5: #{protocls_forward.1} parent=1 // pred_fallthru
      _
    // Predicated region
    $region6: #{protocls_forward.1} parent=1 // pred_check
      _
    $region7: #{protocls_forward.1} parent=1 // pred_check_branch
      %12 = sbr.rel (0) target = $region9
    $region8: #{protocls_forward.1} parent=1 // pred_region
      %s14 = ssub.s32 1024, 1024
      %15 = vsyncadd [#allocation3], %s14
      %s16 = sshll.u32 [#allocation2], 4
      %s17 = int_to_ptr.vmem [resolvable:$true] %s16
      %22 = dma.hbm_to_vmem [thread:$0]  %s1, 1024, %s17, [#allocation3], 64, 64, 4
    $region9: #{protocls_forward.1} parent=1 // pred_fallthru
      _
    // Predicated region
    $region10: #{protocls_forward.1} parent=1 // pred_check
      _
    $region11: #{protocls_forward.1} parent=1 // pred_check_branch
      %24 = sbr.rel (0) target = $region13
    $region12: #{protocls_forward.1} parent=1 // pred_region
      %25 = dma.done [#allocation3], 1024
    $region13: #{protocls_forward.1} parent=1 // pred_fallthru
      _
    %v27 = vld [vmem:[%s0] sm:$0xff]
    %v28 = vmul.f32 %v27, %v27
    %29 = vadd.xlane.f32.xlu0 %v28
    %v30 = vpop.xlane.xlu0 %29
    %v31 = vmax.f32 %v30, 1e-24
    %v32 = vrsqrt.pop %v31
    %v33 = vmul.f32 %v32, 20.0
    %v34 = vmul.f32 %v27, %v33
    %v35 = vpack.c.bf16 %v34, %v34
    %v36 = vld [vmem:[#allocation2] sm:$0xf]
    %v37 = vld [vmem:[#allocation2 + $0x4] sm:$0xf]
    %v38 = vld [vmem:[#allocation2 + $0x8] sm:$0xf]
    %v39 = vld [vmem:[#allocation2 + $0xc] sm:$0xf]
    %v40 = vld [vmem:[#allocation2 + $0x10] sm:$0xf]
    %v41 = vld [vmem:[#allocation2 + $0x14] sm:$0xf]
    %v42 = vld [vmem:[#allocation2 + $0x18] sm:$0xf]
    %v43 = vld [vmem:[#allocation2 + $0x1c] sm:$0xf]
    %v44 = vld [vmem:[#allocation2 + $0x20] sm:$0xf]
    %v45 = vld [vmem:[#allocation2 + $0x24] sm:$0xf]
    %v46 = vld [vmem:[#allocation2 + $0x28] sm:$0xf]
    %v47 = vld [vmem:[#allocation2 + $0x2c] sm:$0xf]
    %v48 = vld [vmem:[#allocation2 + $0x30] sm:$0xf]
    %v49 = vld [vmem:[#allocation2 + $0x34] sm:$0xf]
    %v50 = vld [vmem:[#allocation2 + $0x38] sm:$0xf]
    %v51 = vld [vmem:[#allocation2 + $0x3c] sm:$0xf]
    %v68 = vunpack.c.l.b16 %v36
    %v69 = vunpack.c.l.b16 %v37
    %v70 = vunpack.c.l.b16 %v38
    %v71 = vunpack.c.l.b16 %v39
    %v72 = vunpack.c.l.b16 %v40
    %v73 = vunpack.c.l.b16 %v41
    %v74 = vunpack.c.l.b16 %v42
    %v75 = vunpack.c.l.b16 %v43
    %v76 = vunpack.c.l.b16 %v44
    %v77 = vunpack.c.l.b16 %v45
    %v78 = vunpack.c.l.b16 %v46
    %v79 = vunpack.c.l.b16 %v47
    %v80 = vunpack.c.l.b16 %v48
    %v81 = vunpack.c.l.b16 %v49
    %v82 = vunpack.c.l.b16 %v50
    %v83 = vunpack.c.l.b16 %v51
    %v84 = vpack.c.b16 %v69, %v68
    %v85 = vpack.c.b16 %v71, %v70
    %v86 = vpack.c.b16 %v73, %v72
    %v87 = vpack.c.b16 %v75, %v74
    %v88 = vpack.c.b16 %v77, %v76
    %v89 = vpack.c.b16 %v79, %v78
    %v90 = vpack.c.b16 %v81, %v80
    %v91 = vpack.c.b16 %v83, %v82
    %100 = vmatprep.subr.bf16.mxu0 0
    %101 = vmatpush1.bf16.msra.mxu0 %v91
    %102 = vmatprep.subr.bf16.mxu0 0
    %103 = vmatpush1.bf16.msra.mxu0 %v90
    %104 = vmatprep.subr.bf16.mxu0 0
    %105 = vmatpush1.bf16.msra.mxu0 %v89
    %106 = vmatprep.subr.bf16.mxu0 0
    %107 = vmatpush1.bf16.msra.mxu0 %v88
    %108 = vmatprep.subr.bf16.mxu0 0
    %109 = vmatpush1.bf16.msra.mxu0 %v87
    %110 = vmatprep.subr.bf16.mxu0 0
    %111 = vmatpush1.bf16.msra.mxu0 %v86
    %112 = vmatprep.subr.bf16.mxu0 0
    %113 = vmatpush1.bf16.msra.mxu0 %v85
    %114 = vmatprep.subr.bf16.mxu0 0
    %115 = vmatpush1.bf16.msra.mxu0 %v84
    %116 = vmatprep.subr.bf16.mxu0 0
    %117 = vmatpush2.bf16.msra.mxu0 0
    %118 = vmatprep.subr.bf16.mxu0 0
    %119 = vmatpush2.bf16.msra.mxu0 0
    %120 = vmatprep.subr.bf16.mxu0 0
    %121 = vmatpush2.bf16.msra.mxu0 0
    %122 = vmatprep.subr.bf16.mxu0 0
    %123 = vmatpush2.bf16.msra.mxu0 0
    %124 = vmatprep.subr.bf16.mxu0 0
    %125 = vmatpush2.bf16.msra.mxu0 0
    %126 = vmatprep.subr.bf16.mxu0 0
    %127 = vmatpush2.bf16.msra.mxu0 0
    %128 = vmatprep.subr.bf16.mxu0 0
    %129 = vmatpush2.bf16.msra.mxu0 0
    %130 = vmatprep.subr.bf16.mxu0 0
    %131 = vmatpush2.bf16.msra.mxu0 0
    %132 = vmatprep.mubr.bf16.mxu0 0
    %133 = vmatmul.mubr.bf16.gmra.mxu0 %v35
    %v134 = vpop.f32.mrf.mxu0
    %v135 = vadd.f32 0.0, %v134
    %v136 = vpop.f32.mrf.mxu0
    %v137 = vpop.f32.mrf.mxu0
    %v138 = vpop.f32.mrf.mxu0
    %139 = vdwg.mxu0
    %140 = vst [vmem:[#allocation5] sm:$0xff] %v135
    // Predicated region
    $region14: #{protocls_forward.1} parent=1 // pred_check
      _
    $region15: #{protocls_forward.1} parent=1 // pred_check_branch
      %142 = sbr.rel (0) target = $region17
    $region16: #{protocls_forward.1} parent=1 // pred_region
      %s144 = ssub.s32 128, 128
      %145 = vsyncadd [#allocation4], %s144
      %s147 = sshll.u32 [#allocation5], 4
      %s148 = int_to_ptr.vmem [resolvable:$true] %s147
      %150 = dma.vmem_to_hbm [thread:$0]  %s148, 128, %s2, [#allocation4]
    $region17: #{protocls_forward.1} parent=1 // pred_fallthru
      _
    // Predicated region
    $region18: #{protocls_forward.1} parent=1 // pred_check
      _
    $region19: #{protocls_forward.1} parent=1 // pred_check_branch
      %152 = sbr.rel (0) target = $region21
    $region20: #{protocls_forward.1} parent=1 // pred_region
      %153 = dma.done [#allocation4], 128
    $region21: #{protocls_forward.1} parent=1 // pred_fallthru
      _
    %154 = vsyncpa [#allocation3], 1
    %155 = vsyncpa [#allocation4], 1

</llo_original>
